<compile_context>
chip_gen: v7x
topology: tpu7x:2x2x1
jax: 0.10.0
libtpu: 0.0.40
codegen_flags: <defaults>
</compile_context>

<pallas_src>
import jax
import jax.numpy as jnp
from jax.experimental import pallas as pl
from jax.experimental.pallas import tpu as pltpu


def _batch_tiling(B, N):
    """Pick the query-batch tile TB (rows per grid step) and padded batch size."""
    if B <= 8:
        return B, B
    tb = 8
    # Grow TB (staying a multiple of 8) until the per-step matmul has >=128 rows.
    while tb * N < 128 and tb < 64:
        tb *= 2
    b_pad = -(-B // tb) * tb
    return tb, b_pad


# ----------------------------------------------------------------------------
# Pairwise (matched q[b] <-> d[b]) MaxSim scores: the default forward path.
# ----------------------------------------------------------------------------
def _pairwise_scores_kernel(q_ref, d_ref, nd_ref, pos_ref, neg_ref):
    # q_ref: (TB, N, D), d_ref: (TB, S, D), nd_ref: (TB, Sn, D)
    dn = (((2,), (2,)), ((0,), (0,)))  # contract D, batch over TB (MXU batched matmul)
    sim_pos = jax.lax.dot_general(q_ref[...], d_ref[...], dn,
                                  preferred_element_type=jnp.float32)   # (TB, N, S)
    sim_neg = jax.lax.dot_general(q_ref[...], nd_ref[...], dn,
                                  preferred_element_type=jnp.float32)   # (TB, N, Sn)
    # MaxSim: max over doc tokens (lane reduce), sum over query tokens (sublane reduce).
    pos_ref[...] = jnp.sum(jnp.max(sim_pos, axis=2), axis=1, keepdims=True)  # (TB, 1)
    neg_ref[...] = jnp.sum(jnp.max(sim_neg, axis=2), axis=1, keepdims=True)  # (TB, 1)


def colbert_pairwise_scores(q, d, nd):
    """pos[b], neg[b] = sum_n max_s <q[b,n], d[b,s]>, sum_n max_s <q[b,n], nd[b,s]>."""
    B, N, D = q.shape
    _, S, _ = d.shape
    _, Sn, _ = nd.shape
    TB, B_pad = _batch_tiling(B, N)
    if B_pad != B:
        pad = ((0, B_pad - B), (0, 0), (0, 0))
        q, d, nd = jnp.pad(q, pad), jnp.pad(d, pad), jnp.pad(nd, pad)

    pos, neg = pl.pallas_call(
        _pairwise_scores_kernel,
        out_shape=(jax.ShapeDtypeStruct((B_pad, 1), jnp.float32),
                   jax.ShapeDtypeStruct((B_pad, 1), jnp.float32)),
        grid_spec=pltpu.PrefetchScalarGridSpec(
            num_scalar_prefetch=0,
            grid=(B_pad // TB,),
            in_specs=[pl.BlockSpec((TB, N, D), lambda i: (i, 0, 0)),
                      pl.BlockSpec((TB, S, D), lambda i: (i, 0, 0)),
                      pl.BlockSpec((TB, Sn, D), lambda i: (i, 0, 0))],
            out_specs=[pl.BlockSpec((TB, 1), lambda i: (i, 0)),
                       pl.BlockSpec((TB, 1), lambda i: (i, 0))],
        ),
        compiler_params=pltpu.CompilerParams(
            dimension_semantics=("parallel",)),
    )(q, d, nd)
    return pos[:B, 0], neg[:B, 0]


# ----------------------------------------------------------------------------
# Cross-batch MaxSim score matrix (optional in_batch_term path).
# ----------------------------------------------------------------------------
def _inbatch_scores_kernel(q_ref, d_ref, out_ref):
    # q_ref: (TB, N, D) query tile; d_ref: (C, S, D) all docs; out_ref: (TB, C)
    TB, N, D = q_ref.shape
    C, S, _ = d_ref.shape
    Q = TB * N
    q2 = q_ref[...].reshape(Q, D)          # merge leading dims only (layout no-op)
    d2 = d_ref[...].reshape(C * S, D)
    # One big MXU matmul instead of C tiny per-doc matmuls:
    # sim[c*S + s, b*N + n] = <d[c, s], q[b, n]>
    sim = jax.lax.dot_general(d2, q2, (((1,), (1,)), ((), ())),
                              preferred_element_type=jnp.float32)       # (C*S, Q)
    # Max over doc tokens s: leading-dim split reshape + reduce (XLU), lane dim untouched.
    mx = jnp.max(sim.reshape(C, S, Q), axis=1)                          # (C, Q)
    # Sum over query tokens n within each b via a block-diagonal 0/1 matmul (MXU);
    # avoids any lane-splitting reshape of the matmul output.
    b_idx = jax.lax.broadcasted_iota(jnp.int32, (TB, Q), 0)
    q_idx = jax.lax.broadcasted_iota(jnp.int32, (TB, Q), 1)
    sel = ((q_idx >= b_idx * N) & (q_idx < (b_idx + 1) * N)).astype(jnp.float32)
    out_ref[...] = jax.lax.dot_general(sel, mx, (((1,), (1,)), ((), ())),
                                       preferred_element_type=jnp.float32)  # (TB, C)


def colbert_inbatch_scores(q, d):
    """scores[b, c] = sum_n max_s <q[b,n], d[c,s]>  (full B x C MaxSim matrix)."""
    B, N, D = q.shape
    C, S, _ = d.shape
    TB, B_pad = _batch_tiling(B, N)
    if B_pad != B:
        q = jnp.pad(q, ((0, B_pad - B), (0, 0), (0, 0)))

    scores = pl.pallas_call(
        _inbatch_scores_kernel,
        out_shape=jax.ShapeDtypeStruct((B_pad, C), jnp.float32),
        grid_spec=pltpu.PrefetchScalarGridSpec(
            num_scalar_prefetch=0,
            grid=(B_pad // TB,),
            in_specs=[
                pl.BlockSpec((TB, N, D), lambda i: (i, 0, 0)),
                # All docs resident every step (constant index map).
                # TODO(synk): at large C*S*D, add a C-tile grid axis and/or
                # single-buffer this operand so the doc block fits v7x's 64 MiB
                # VMEM, and set vmem_limit_bytes in CompilerParams accordingly.
                pl.BlockSpec((C, S, D), lambda i: (0, 0, 0)),
            ],
            out_specs=pl.BlockSpec((TB, C), lambda i: (i, 0)),
        ),
        compiler_params=pltpu.CompilerParams(
            dimension_semantics=("parallel",)),
    )(q, d)
    return scores[:B]


# ----------------------------------------------------------------------------
# Loss (matches ColbertPairwiseNegativeCELoss.forward).
# ----------------------------------------------------------------------------
def colbert_pairwise_negative_ce_loss(query_embeddings, doc_embeddings,
                                      neg_doc_embeddings, in_batch_term=False):
    pos, neg = colbert_pairwise_scores(query_embeddings, doc_embeddings,
                                       neg_doc_embeddings)
    loss = jnp.mean(jax.nn.softplus(neg - pos))
    if in_batch_term:
        scores = colbert_inbatch_scores(query_embeddings, doc_embeddings)  # (B, B)
        pos_ib = jnp.diagonal(scores)
        neg_ib = jnp.max(
            scores - jnp.eye(scores.shape[0], dtype=scores.dtype) * 1000000.0, axis=1)
        loss = loss + jnp.mean(jax.nn.softplus(neg_ib - pos_ib))
    return loss / 2


# ----------------------------------------------------------------------------
# Plain-JAX reference (mirrors the PyTorch module).
# ----------------------------------------------------------------------------
def _loss_ref(q, d, nd, in_batch_term=False):
    hp = jax.lax.Precision.HIGHEST
    pos = jnp.einsum('bnd,bsd->bns', q, d, precision=hp).max(axis=2).sum(axis=1)
    neg = jnp.einsum('bnd,bsd->bns', q, nd, precision=hp).max(axis=2).sum(axis=1)
    loss = jnp.mean(jax.nn.softplus(neg - pos))
    if in_batch_term:
        scores = jnp.einsum('bnd,csd->bcns', q, d,
                            precision=hp).max(axis=3).sum(axis=2)
        pos_ib = jnp.diagonal(scores)
        neg_ib = jnp.max(scores - jnp.eye(scores.shape[0]) * 1000000.0, axis=1)
        loss = loss + jnp.mean(jax.nn.softplus(neg_ib - pos_ib))
    return loss / 2


if __name__ == "__main__":
    key = jax.random.PRNGKey(0)
    kq, kd, kn = jax.random.split(key, 3)

    B, N, D = 4, 8, 32      # batch, query tokens, embedding dim
    S, Sn = 16, 12          # doc tokens, negative-doc tokens

    q = jax.random.normal(kq, (B, N, D), dtype=jnp.float32)
    d = jax.random.normal(kd, (B, S, D), dtype=jnp.float32)
    nd = jax.random.normal(kn, (B, Sn, D), dtype=jnp.float32)

    # Default module config (in_batch_term=False).
    loss = colbert_pairwise_negative_ce_loss(q, d, nd)
    jax.block_until_ready(loss)
    ref = _loss_ref(q, d, nd)
    assert jnp.allclose(loss, ref, atol=1e-3, rtol=1e-3), (loss, ref)

    # Optional in-batch term (in_batch_term=True).
    loss_ib = colbert_pairwise_negative_ce_loss(q, d, nd, in_batch_term=True)
    jax.block_until_ready(loss_ib)
    ref_ib = _loss_ref(q, d, nd, in_batch_term=True)
    assert jnp.allclose(loss_ib, ref_ib, atol=1e-3, rtol=1e-3), (loss_ib, ref_ib)

    print("KERNEL_OK")
</pallas_src>

<mosaic_0001>
module attributes {stable_mosaic.version = 11 : i64} {
  func.func @_pairwise_scores_kernel(%arg0: i32, %arg1: memref<4x8x32xf32, #tpu.memory_space<vmem>>, %arg2: memref<4x16x32xf32, #tpu.memory_space<vmem>>, %arg3: memref<4x12x32xf32, #tpu.memory_space<vmem>>, %arg4: memref<4x1xf32, #tpu.memory_space<vmem>>, %arg5: memref<4x1xf32, #tpu.memory_space<vmem>>) attributes {dimension_semantics = [#tpu.dimension_semantics<parallel>], iteration_bounds = array<i64: 1>, scalar_prefetch = 0 : i64, scratch_operands = 0 : i64, tpu.core_type = #tpu.core_type<tc>, window_params = [{transform_indices = @transform_0, window_bounds = array<i64: 4, 8, 32>}, {transform_indices = @transform_1, window_bounds = array<i64: 4, 16, 32>}, {transform_indices = @transform_2, window_bounds = array<i64: 4, 12, 32>}, {transform_indices = @transform_3, window_bounds = array<i64: 4, 1>}, {transform_indices = @transform_4, window_bounds = array<i64: 4, 1>}]} {
    %c0 = arith.constant 0 : index
    %c0_0 = arith.constant 0 : index
    %c0_1 = arith.constant 0 : index
    %0 = vector.load %arg1[%c0, %c0_0, %c0_1] : memref<4x8x32xf32, #tpu.memory_space<vmem>>, vector<4x8x32xf32>
    %c0_2 = arith.constant 0 : index
    %c0_3 = arith.constant 0 : index
    %c0_4 = arith.constant 0 : index
    %1 = vector.load %arg2[%c0_2, %c0_3, %c0_4] : memref<4x16x32xf32, #tpu.memory_space<vmem>>, vector<4x16x32xf32>
    %cst = arith.constant dense<0.000000e+00> : vector<4x8x16xf32>
    %2 = tpu.matmul %0, %1, %cst {dimension_numbers = #tpu.dot_dimension_numbers<[2], [2], [1], [1], [0, 0, 0, 1, 1, 1], [0], [0]>} : vector<4x8x32xf32>, vector<4x16x32xf32>, vector<4x8x16xf32> -> vector<4x8x16xf32>
    %c0_5 = arith.constant 0 : index
    %c0_6 = arith.constant 0 : index
    %c0_7 = arith.constant 0 : index
    %3 = vector.load %arg1[%c0_5, %c0_6, %c0_7] : memref<4x8x32xf32, #tpu.memory_space<vmem>>, vector<4x8x32xf32>
    %c0_8 = arith.constant 0 : index
    %c0_9 = arith.constant 0 : index
    %c0_10 = arith.constant 0 : index
    %4 = vector.load %arg3[%c0_8, %c0_9, %c0_10] : memref<4x12x32xf32, #tpu.memory_space<vmem>>, vector<4x12x32xf32>
    %cst_11 = arith.constant dense<0.000000e+00> : vector<4x8x12xf32>
    %5 = tpu.matmul %3, %4, %cst_11 {dimension_numbers = #tpu.dot_dimension_numbers<[2], [2], [1], [1], [0, 0, 0, 1, 1, 1], [0], [0]>} : vector<4x8x32xf32>, vector<4x12x32xf32>, vector<4x8x12xf32> -> vector<4x8x12xf32>
    %cst_12 = arith.constant dense<0xFF800000> : vector<4x8xf32>
    %6 = vector.multi_reduction <maximumf>, %2, %cst_12 [2] : vector<4x8x16xf32> to vector<4x8xf32>
    %cst_13 = arith.constant dense<0.000000e+00> : vector<4xf32>
    %7 = vector.multi_reduction <add>, %6, %cst_13 [1] : vector<4x8xf32> to vector<4xf32>
    %8 = vector.shape_cast %7 : vector<4xf32> to vector<4x1xf32>
    %c0_14 = arith.constant 0 : index
    %c0_15 = arith.constant 0 : index
    %9 = vector.load %arg4[%c0_14, %c0_15] : memref<4x1xf32, #tpu.memory_space<vmem>>, vector<4x1xf32>
    tpu.vector_store %arg4[%c0_14, %c0_15], %8 {strides = array<i32>} : memref<4x1xf32, #tpu.memory_space<vmem>>, vector<4x1xf32>,
    %cst_16 = arith.constant dense<0xFF800000> : vector<4x8xf32>
    %10 = vector.multi_reduction <maximumf>, %5, %cst_16 [2] : vector<4x8x12xf32> to vector<4x8xf32>
    %cst_17 = arith.constant dense<0.000000e+00> : vector<4xf32>
    %11 = vector.multi_reduction <add>, %10, %cst_17 [1] : vector<4x8xf32> to vector<4xf32>
    %12 = vector.shape_cast %11 : vector<4xf32> to vector<4x1xf32>
    %c0_18 = arith.constant 0 : index
    %c0_19 = arith.constant 0 : index
    %13 = vector.load %arg5[%c0_18, %c0_19] : memref<4x1xf32, #tpu.memory_space<vmem>>, vector<4x1xf32>
    tpu.vector_store %arg5[%c0_18, %c0_19], %12 {strides = array<i32>} : memref<4x1xf32, #tpu.memory_space<vmem>>, vector<4x1xf32>,
    return
  }
  func.func @transform_0(%arg0: i32) -> (i32, i32, i32) {
    %c0_i32 = arith.constant 0 : i32
    %c0_i32_0 = arith.constant 0 : i32
    %c0_i32_1 = arith.constant 0 : i32
    return %arg0, %c0_i32, %c0_i32_0 : i32, i32, i32
  }
  func.func @transform_1(%arg0: i32) -> (i32, i32, i32) {
    %c0_i32 = arith.constant 0 : i32
    %c0_i32_0 = arith.constant 0 : i32
    %c0_i32_1 = arith.constant 0 : i32
    return %arg0, %c0_i32, %c0_i32_0 : i32, i32, i32
  }
  func.func @transform_2(%arg0: i32) -> (i32, i32, i32) {
    %c0_i32 = arith.constant 0 : i32
    %c0_i32_0 = arith.constant 0 : i32
    %c0_i32_1 = arith.constant 0 : i32
    return %arg0, %c0_i32, %c0_i32_0 : i32, i32, i32
  }
  func.func @transform_3(%arg0: i32) -> (i32, i32) {
    %c0_i32 = arith.constant 0 : i32
    %c0_i32_0 = arith.constant 0 : i32
    return %arg0, %c0_i32 : i32, i32
  }
  func.func @transform_4(%arg0: i32) -> (i32, i32) {
    %c0_i32 = arith.constant 0 : i32
    %c0_i32_0 = arith.constant 0 : i32
    return %arg0, %c0_i32 : i32, i32
  }
}

</mosaic_0001>

<llo_original>
// kernel: tpu_custom_call.1
$region0: #{tpu_custom_call.1}
  #allocation0 [shape = 'u32[]', space=smem, size = 0x4, offset = 0x4, fixed_abs, tag = 'smem constant byte address 0x4 - core index']
  #allocation1 [shape = 'u32[144,128]{1,0:T(1,128)}', space=vmem, size = 0x12000, scoped, tag = 'internal scratch']
  %s0 = inlined_call_operand.vmem [shape: f32[4,8,32], index: 0, kind: input, shape index: {}]
  %s1 = inlined_call_operand.vmem [shape: f32[4,16,32], index: 1, kind: input, shape index: {}]
  %s2 = inlined_call_operand.vmem [shape: f32[4,12,32], index: 2, kind: input, shape index: {}]
  %s3 = inlined_call_operand.vmem [shape: f32[4,1], index: 3, kind: output, shape index: {0}]
  %s4 = inlined_call_operand.vmem [shape: f32[4,1], index: 4, kind: output, shape index: {1}]
  %5 = xla_tuple %s3, %s4
  %s6 = sld [smem:[#allocation0]]
  $region30: #{tpu_custom_call.1} parent=0
    _
  %s8 = ssub.s32 1, %s6
  %s9 = scalar_select 0, %s8, %s6
  // Predicated region
  $region2: #{tpu_custom_call.1} parent=0 // pred_check
    _
  $region3: #{tpu_custom_call.1} parent=0 // pred_check_branch
    %11 = sbr.rel (0) target = $region5
  $region4: #{tpu_custom_call.1} parent=0 // pred_region
    _
  $region5: #{tpu_custom_call.1} parent=0 // pred_fallthru
    _
  // Predicated region
  $region6: #{tpu_custom_call.1} parent=0 // pred_check
    _
  $region7: #{tpu_custom_call.1} parent=0 // pred_check_branch
    %13 = sbr.rel (0) target = $region9
  $region8: #{tpu_custom_call.1} parent=0 // pred_region
    _
  $region9: #{tpu_custom_call.1} parent=0 // pred_fallthru
    _
  // Predicated region
  $region10: #{tpu_custom_call.1} parent=0 // pred_check
    _
  $region11: #{tpu_custom_call.1} parent=0 // pred_check_branch
    %15 = sbr.rel (0) target = $region13
  $region12: #{tpu_custom_call.1} parent=0 // pred_region
    _
  $region13: #{tpu_custom_call.1} parent=0 // pred_fallthru
    _
  %v16 = vld [vmem:[%s0] sm:$0xff]
  %v17 = vld [vmem:[%s0 + $0x8] sm:$0xff]
  %v18 = vld [vmem:[%s0 + $0x10] sm:$0xff]
  %v19 = vld [vmem:[%s0 + $0x18] sm:$0xff]
  %v20 = vld [vmem:[%s1] sm:$0xff]
  %v21 = vld [vmem:[%s1 + $0x8] sm:$0xff]
  %v22 = vld [vmem:[%s1 + $0x10] sm:$0xff]
  %v23 = vld [vmem:[%s1 + $0x18] sm:$0xff]
  %v24 = vld [vmem:[%s1 + $0x20] sm:$0xff]
  %v25 = vld [vmem:[%s1 + $0x28] sm:$0xff]
  %v26 = vld [vmem:[%s1 + $0x30] sm:$0xff]
  %v27 = vld [vmem:[%s1 + $0x38] sm:$0xff]
  %vm28 = vcmask 261120
  %v30 = vsel %vm28, %v16, 0
  %v33 = vsel %vm28, %v20, 0
  %v36 = vsel %vm28, %v21, 0
  %38 = vmatprep.subr.mxu0 0.0
  %39 = vmatpush1.xpose.msra.mxu0 %v33
  %40 = vmatprep.subr.mxu0 0.0
  %41 = vmatpush1.xpose.msra.mxu0 %v36
  %42 = vmatprep.subr.mxu0 0.0
  %43 = vmatpush1.xpose.msra.mxu0 0.0
  %44 = vmatprep.subr.mxu0 0.0
  %45 = vmatpush1.xpose.msra.mxu0 0.0
  %46 = vmatprep.subr.mxu0 0.0
  %47 = vmatpush1.xpose.msra.mxu0 0.0
  %48 = vmatprep.subr.mxu0 0.0
  %49 = vmatpush1.xpose.msra.mxu0 0.0
  %50 = vmatprep.subr.mxu0 0.0
  %51 = vmatpush1.xpose.msra.mxu0 0.0
  %52 = vmatprep.subr.mxu0 0.0
  %53 = vmatpush1.xpose.msra.mxu0 0.0
  %54 = vmatprep.subr.mxu0 0.0
  %55 = vmatpush1.xpose.msra.mxu0 0.0
  %56 = vmatprep.subr.mxu0 0.0
  %57 = vmatpush1.xpose.msra.mxu0 0.0
  %58 = vmatprep.subr.mxu0 0.0
  %59 = vmatpush1.xpose.msra.mxu0 0.0
  %60 = vmatprep.subr.mxu0 0.0
  %61 = vmatpush1.xpose.msra.mxu0 0.0
  %62 = vmatprep.subr.mxu0 0.0
  %63 = vmatpush1.xpose.msra.mxu0 0.0
  %64 = vmatprep.subr.mxu0 0.0
  %65 = vmatpush1.xpose.msra.mxu0 0.0
  %66 = vmatprep.subr.mxu0 0.0
  %67 = vmatpush1.xpose.msra.mxu0 0.0
  %68 = vmatprep.subr.mxu0 0.0
  %69 = vmatpush1.xpose.msra.mxu0 0.0
  %70 = vmatprep.subr.mxu0 0.0
  %71 = vmatpush1.xpose.msra.mxu0 0.0
  %72 = vmatprep.subr.mxu0 0.0
  %73 = vmatpush1.xpose.msra.mxu0 0.0
  %74 = vmatprep.subr.mxu0 0.0
  %75 = vmatpush1.xpose.msra.mxu0 0.0
  %76 = vmatprep.subr.mxu0 0.0
  %77 = vmatpush1.xpose.msra.mxu0 0.0
  %78 = vmatprep.subr.mxu0 0.0
  %79 = vmatpush1.xpose.msra.mxu0 0.0
  %80 = vmatprep.subr.mxu0 0.0
  %81 = vmatpush1.xpose.msra.mxu0 0.0
  %82 = vmatprep.subr.mxu0 0.0
  %83 = vmatpush1.xpose.msra.mxu0 0.0
  %84 = vmatprep.subr.mxu0 0.0
  %85 = vmatpush1.xpose.msra.mxu0 0.0
  %86 = vmatprep.subr.mxu0 0.0
  %87 = vmatpush1.xpose.msra.mxu0 0.0
  %88 = vmatprep.subr.mxu0 0.0
  %89 = vmatpush1.xpose.msra.mxu0 0.0
  %90 = vmatprep.subr.mxu0 0.0
  %91 = vmatpush1.xpose.msra.mxu0 0.0
  %92 = vmatprep.subr.mxu0 0.0
  %93 = vmatpush1.xpose.msra.mxu0 0.0
  %94 = vmatprep.subr.mxu0 0.0
  %95 = vmatpush1.xpose.msra.mxu0 0.0
  %96 = vmatprep.subr.mxu0 0.0
  %97 = vmatpush1.xpose.msra.mxu0 0.0
  %98 = vmatprep.subr.mxu0 0.0
  %99 = vmatpush1.xpose.msra.mxu0 0.0
  %100 = vmatprep.subr.mxu0 0.0
  %101 = vmatpush1.xpose.msra.mxu0 0.0
  %102 = vmatprep.mubr.f32.mxu0 0.0
  %103 = vmatmul.mubr.f32.gmra.mrb[0].mxu0 %v30
  %v104 = vpop.f32.mrb[0].mxu0
  %v105 = vadd.f32 0.0, %v104
  %v106 = vpop.f32.mrb[0].mxu0
  %107 = vdwg.mxu0
  %v109 = vsel %vm28, %v17, 0
  %v112 = vsel %vm28, %v22, 0
  %v115 = vsel %vm28, %v23, 0
  %117 = vmatprep.subr.mxu0 0.0
  %118 = vmatpush1.xpose.msra.mxu0 %v112
  %119 = vmatprep.subr.mxu0 0.0
  %120 = vmatpush1.xpose.msra.mxu0 %v115
  %121 = vmatprep.subr.mxu0 0.0
  %122 = vmatpush1.xpose.msra.mxu0 0.0
  %123 = vmatprep.subr.mxu0 0.0
  %124 = vmatpush1.xpose.msra.mxu0 0.0
  %125 = vmatprep.subr.mxu0 0.0
  %126 = vmatpush1.xpose.msra.mxu0 0.0
  %127 = vmatprep.subr.mxu0 0.0
  %128 = vmatpush1.xpose.msra.mxu0 0.0
  %129 = vmatprep.subr.mxu0 0.0
  %130 = vmatpush1.xpose.msra.mxu0 0.0
  %131 = vmatprep.subr.mxu0 0.0
  %132 = vmatpush1.xpose.msra.mxu0 0.0
  %133 = vmatprep.subr.mxu0 0.0
  %134 = vmatpush1.xpose.msra.mxu0 0.0
  %135 = vmatprep.subr.mxu0 0.0
  %136 = vmatpush1.xpose.msra.mxu0 0.0
  %137 = vmatprep.subr.mxu0 0.0
  %138 = vmatpush1.xpose.msra.mxu0 0.0
  %139 = vmatprep.subr.mxu0 0.0
  %140 = vmatpush1.xpose.msra.mxu0 0.0
  %141 = vmatprep.subr.mxu0 0.0
  %142 = vmatpush1.xpose.msra.mxu0 0.0
  %143 = vmatprep.subr.mxu0 0.0
  %144 = vmatpush1.xpose.msra.mxu0 0.0
  %145 = vmatprep.subr.mxu0 0.0
  %146 = vmatpush1.xpose.msra.mxu0 0.0
  %147 = vmatprep.subr.mxu0 0.0
  %148 = vmatpush1.xpose.msra.mxu0 0.0
  %149 = vmatprep.subr.mxu0 0.0
  %150 = vmatpush1.xpose.msra.mxu0 0.0
  %151 = vmatprep.subr.mxu0 0.0
  %152 = vmatpush1.xpose.msra.mxu0 0.0
  %153 = vmatprep.subr.mxu0 0.0
  %154 = vmatpush1.xpose.msra.mxu0 0.0
  %155 = vmatprep.subr.mxu0 0.0
  %156 = vmatpush1.xpose.msra.mxu0 0.0
  %157 = vmatprep.subr.mxu0 0.0
  %158 = vmatpush1.xpose.msra.mxu0 0.0
  %159 = vmatprep.subr.mxu0 0.0
  %160 = vmatpush1.xpose.msra.mxu0 0.0
  %161 = vmatprep.subr.mxu0 0.0
  %162 = vmatpush1.xpose.msra.mxu0 0.0
  %163 = vmatprep.subr.mxu0 0.0
  %164 = vmatpush1.xpose.msra.mxu0 0.0
  %165 = vmatprep.subr.mxu0 0.0
  %166 = vmatpush1.xpose.msra.mxu0 0.0
  %167 = vmatprep.subr.mxu0 0.0
  %168 = vmatpush1.xpose.msra.mxu0 0.0
  %169 = vmatprep.subr.mxu0 0.0
  %170 = vmatpush1.xpose.msra.mxu0 0.0
  %171 = vmatprep.subr.mxu0 0.0
  %172 = vmatpush1.xpose.msra.mxu0 0.0
  %173 = vmatprep.subr.mxu0 0.0
  %174 = vmatpush1.xpose.msra.mxu0 0.0
  %175 = vmatprep.subr.mxu0 0.0
  %176 = vmatpush1.xpose.msra.mxu0 0.0
  %177 = vmatprep.subr.mxu0 0.0
  %178 = vmatpush1.xpose.msra.mxu0 0.0
  %179 = vmatprep.subr.mxu0 0.0
  %180 = vmatpush1.xpose.msra.mxu0 0.0
  %181 = vmatprep.mubr.f32.mxu0 0.0
  %182 = vmatmul.mubr.f32.gmra.mrb[0].mxu0 %v109
  %v183 = vpop.f32.mrb[0].mxu0
  %v184 = vadd.f32 0.0, %v183
  %v185 = vpop.f32.mrb[0].mxu0
  %186 = vdwg.mxu0
  %v188 = vsel %vm28, %v18, 0
  %v191 = vsel %vm28, %v24, 0
  %v194 = vsel %vm28, %v25, 0
  %196 = vmatprep.subr.mxu0 0.0
  %197 = vmatpush1.xpose.msra.mxu0 %v191
  %198 = vmatprep.subr.mxu0 0.0
  %199 = vmatpush1.xpose.msra.mxu0 %v194
  %200 = vmatprep.subr.mxu0 0.0
  %201 = vmatpush1.xpose.msra.mxu0 0.0
  %202 = vmatprep.subr.mxu0 0.0
  %203 = vmatpush1.xpose.msra.mxu0 0.0
  %204 = vmatprep.subr.mxu0 0.0
  %205 = vmatpush1.xpose.msra.mxu0 0.0
  %206 = vmatprep.subr.mxu0 0.0
  %207 = vmatpush1.xpose.msra.mxu0 0.0
  %208 = vmatprep.subr.mxu0 0.0
  %209 = vmatpush1.xpose.msra.mxu0 0.0
  %210 = vmatprep.subr.mxu0 0.0
  %211 = vmatpush1.xpose.msra.mxu0 0.0
  %212 = vmatprep.subr.mxu0 0.0
  %213 = vmatpush1.xpose.msra.mxu0 0.0
  %214 = vmatprep.subr.mxu0 0.0
  %215 = vmatpush1.xpose.msra.mxu0 0.0
  %216 = vmatprep.subr.mxu0 0.0
  %217 = vmatpush1.xpose.msra.mxu0 0.0
  %218 = vmatprep.subr.mxu0 0.0
  %219 = vmatpush1.xpose.msra.mxu0 0.0
  %220 = vmatprep.subr.mxu0 0.0
  %221 = vmatpush1.xpose.msra.mxu0 0.0
  %222 = vmatprep.subr.mxu0 0.0
  %223 = vmatpush1.xpose.msra.mxu0 0.0
  %224 = vmatprep.subr.mxu0 0.0
  %225 = vmatpush1.xpose.msra.mxu0 0.0
  %226 = vmatprep.subr.mxu0 0.0
  %227 = vmatpush1.xpose.msra.mxu0 0.0
  %228 = vmatprep.subr.mxu0 0.0
  %229 = vmatpush1.xpose.msra.mxu0 0.0
  %230 = vmatprep.subr.mxu0 0.0
  %231 = vmatpush1.xpose.msra.mxu0 0.0
  %232 = vmatprep.subr.mxu0 0.0
  %233 = vmatpush1.xpose.msra.mxu0 0.0
  %234 = vmatprep.subr.mxu0 0.0
  %235 = vmatpush1.xpose.msra.mxu0 0.0
  %236 = vmatprep.subr.mxu0 0.0
  %237 = vmatpush1.xpose.msra.mxu0 0.0
  %238 = vmatprep.subr.mxu0 0.0
  %239 = vmatpush1.xpose.msra.mxu0 0.0
  %240 = vmatprep.subr.mxu0 0.0
  %241 = vmatpush1.xpose.msra.mxu0 0.0
  %242 = vmatprep.subr.mxu0 0.0
  %243 = vmatpush1.xpose.msra.mxu0 0.0
  %244 = vmatprep.subr.mxu0 0.0
  %245 = vmatpush1.xpose.msra.mxu0 0.0
  %246 = vmatprep.subr.mxu0 0.0
  %247 = vmatpush1.xpose.msra.mxu0 0.0
  %248 = vmatprep.subr.mxu0 0.0
  %249 = vmatpush1.xpose.msra.mxu0 0.0
  %250 = vmatprep.subr.mxu0 0.0
  %251 = vmatpush1.xpose.msra.mxu0 0.0
  %252 = vmatprep.subr.mxu0 0.0
  %253 = vmatpush1.xpose.msra.mxu0 0.0
  %254 = vmatprep.subr.mxu0 0.0
  %255 = vmatpush1.xpose.msra.mxu0 0.0
  %256 = vmatprep.subr.mxu0 0.0
  %257 = vmatpush1.xpose.msra.mxu0 0.0
  %258 = vmatprep.subr.mxu0 0.0
  %259 = vmatpush1.xpose.msra.mxu0 0.0
  %260 = vmatprep.mubr.f32.mxu0 0.0
  %261 = vmatmul.mubr.f32.gmra.mrb[0].mxu0 %v188
  %v262 = vpop.f32.mrb[0].mxu0
  %v263 = vadd.f32 0.0, %v262
  %v264 = vpop.f32.mrb[0].mxu0
  %265 = vdwg.mxu0
  %v267 = vsel %vm28, %v19, 0
  %v270 = vsel %vm28, %v26, 0
  %v273 = vsel %vm28, %v27, 0
  %275 = vmatprep.subr.mxu0 0.0
  %276 = vmatpush1.xpose.msra.mxu0 %v270
  %277 = vmatprep.subr.mxu0 0.0
  %278 = vmatpush1.xpose.msra.mxu0 %v273
  %279 = vmatprep.subr.mxu0 0.0
  %280 = vmatpush1.xpose.msra.mxu0 0.0
  %281 = vmatprep.subr.mxu0 0.0
  %282 = vmatpush1.xpose.msra.mxu0 0.0
  %283 = vmatprep.subr.mxu0 0.0
  %284 = vmatpush1.xpose.msra.mxu0 0.0
  %285 = vmatprep.subr.mxu0 0.0
  %286 = vmatpush1.xpose.msra.mxu0 0.0
  %287 = vmatprep.subr.mxu0 0.0
  %288 = vmatpush1.xpose.msra.mxu0 0.0
  %289 = vmatprep.subr.mxu0 0.0
  %290 = vmatpush1.xpose.msra.mxu0 0.0
  %291 = vmatprep.subr.mxu0 0.0
  %292 = vmatpush1.xpose.msra.mxu0 0.0
  %293 = vmatprep.subr.mxu0 0.0
  %294 = vmatpush1.xpose.msra.mxu0 0.0
  %295 = vmatprep.subr.mxu0 0.0
  %296 = vmatpush1.xpose.msra.mxu0 0.0
  %297 = vmatprep.subr.mxu0 0.0
  %298 = vmatpush1.xpose.msra.mxu0 0.0
  %299 = vmatprep.subr.mxu0 0.0
  %300 = vmatpush1.xpose.msra.mxu0 0.0
  %301 = vmatprep.subr.mxu0 0.0
  %302 = vmatpush1.xpose.msra.mxu0 0.0
  %303 = vmatprep.subr.mxu0 0.0
  %304 = vmatpush1.xpose.msra.mxu0 0.0
  %305 = vmatprep.subr.mxu0 0.0
  %306 = vmatpush1.xpose.msra.mxu0 0.0
  %307 = vmatprep.subr.mxu0 0.0
  %308 = vmatpush1.xpose.msra.mxu0 0.0
  %309 = vmatprep.subr.mxu0 0.0
  %310 = vmatpush1.xpose.msra.mxu0 0.0
  %311 = vmatprep.subr.mxu0 0.0
  %312 = vmatpush1.xpose.msra.mxu0 0.0
  %313 = vmatprep.subr.mxu0 0.0
  %314 = vmatpush1.xpose.msra.mxu0 0.0
  %315 = vmatprep.subr.mxu0 0.0
  %316 = vmatpush1.xpose.msra.mxu0 0.0
  %317 = vmatprep.subr.mxu0 0.0
  %318 = vmatpush1.xpose.msra.mxu0 0.0
  %319 = vmatprep.subr.mxu0 0.0
  %320 = vmatpush1.xpose.msra.mxu0 0.0
  %321 = vmatprep.subr.mxu0 0.0
  %322 = vmatpush1.xpose.msra.mxu0 0.0
  %323 = vmatprep.subr.mxu0 0.0
  %324 = vmatpush1.xpose.msra.mxu0 0.0
  %325 = vmatprep.subr.mxu0 0.0
  %326 = vmatpush1.xpose.msra.mxu0 0.0
  %327 = vmatprep.subr.mxu0 0.0
  %328 = vmatpush1.xpose.msra.mxu0 0.0
  %329 = vmatprep.subr.mxu0 0.0
  %330 = vmatpush1.xpose.msra.mxu0 0.0
  %331 = vmatprep.subr.mxu0 0.0
  %332 = vmatpush1.xpose.msra.mxu0 0.0
  %333 = vmatprep.subr.mxu0 0.0
  %334 = vmatpush1.xpose.msra.mxu0 0.0
  %335 = vmatprep.subr.mxu0 0.0
  %336 = vmatpush1.xpose.msra.mxu0 0.0
  %337 = vmatprep.subr.mxu0 0.0
  %338 = vmatpush1.xpose.msra.mxu0 0.0
  %339 = vmatprep.mubr.f32.mxu0 0.0
  %340 = vmatmul.mubr.f32.gmra.mrb[0].mxu0 %v267
  %v341 = vpop.f32.mrb[0].mxu0
  %v342 = vadd.f32 0.0, %v341
  %v343 = vpop.f32.mrb[0].mxu0
  %344 = vdwg.mxu0
  %v345 = vld [vmem:[%s2] sm:$0xff]
  %v346 = vld [vmem:[%s2 + $0x8] sm:$0xf]
  %v347 = vld [vmem:[%s2 + $0x10] sm:$0xff]
  %v348 = vld [vmem:[%s2 + $0x18] sm:$0xf]
  %v349 = vld [vmem:[%s2 + $0x20] sm:$0xff]
  %v350 = vld [vmem:[%s2 + $0x28] sm:$0xf]
  %v351 = vld [vmem:[%s2 + $0x30] sm:$0xff]
  %v352 = vld [vmem:[%s2 + $0x38] sm:$0xf]
  %v354 = vsel %vm28, %v345, 0
  %v357 = vsel %vm28, %v346, 0
  %359 = vmatprep.subr.mxu0 0.0
  %360 = vmatpush1.xpose.msra.mxu0 %v354
  %361 = vmatprep.subr.mxu0 0.0
  %362 = vmatpush1.xpose.msra.mxu0 %v357
  %363 = vmatprep.subr.mxu0 0.0
  %364 = vmatpush1.xpose.msra.mxu0 0.0
  %365 = vmatprep.subr.mxu0 0.0
  %366 = vmatpush1.xpose.msra.mxu0 0.0
  %367 = vmatprep.subr.mxu0 0.0
  %368 = vmatpush1.xpose.msra.mxu0 0.0
  %369 = vmatprep.subr.mxu0 0.0
  %370 = vmatpush1.xpose.msra.mxu0 0.0
  %371 = vmatprep.subr.mxu0 0.0
  %372 = vmatpush1.xpose.msra.mxu0 0.0
  %373 = vmatprep.subr.mxu0 0.0
  %374 = vmatpush1.xpose.msra.mxu0 0.0
  %375 = vmatprep.subr.mxu0 0.0
  %376 = vmatpush1.xpose.msra.mxu0 0.0
  %377 = vmatprep.subr.mxu0 0.0
  %378 = vmatpush1.xpose.msra.mxu0 0.0
  %379 = vmatprep.subr.mxu0 0.0
  %380 = vmatpush1.xpose.msra.mxu0 0.0
  %381 = vmatprep.subr.mxu0 0.0
  %382 = vmatpush1.xpose.msra.mxu0 0.0
  %383 = vmatprep.subr.mxu0 0.0
  %384 = vmatpush1.xpose.msra.mxu0 0.0
  %385 = vmatprep.subr.mxu0 0.0
  %386 = vmatpush1.xpose.msra.mxu0 0.0
  %387 = vmatprep.subr.mxu0 0.0
  %388 = vmatpush1.xpose.msra.mxu0 0.0
  %389 = vmatprep.subr.mxu0 0.0
  %390 = vmatpush1.xpose.msra.mxu0 0.0
  %391 = vmatprep.subr.mxu0 0.0
  %392 = vmatpush1.xpose.msra.mxu0 0.0
  %393 = vmatprep.subr.mxu0 0.0
  %394 = vmatpush1.xpose.msra.mxu0 0.0
  %395 = vmatprep.subr.mxu0 0.0
  %396 = vmatpush1.xpose.msra.mxu0 0.0
  %397 = vmatprep.subr.mxu0 0.0
  %398 = vmatpush1.xpose.msra.mxu0 0.0
  %399 = vmatprep.subr.mxu0 0.0
  %400 = vmatpush1.xpose.msra.mxu0 0.0
  %401 = vmatprep.subr.mxu0 0.0
  %402 = vmatpush1.xpose.msra.mxu0 0.0
  %403 = vmatprep.subr.mxu0 0.0
  %404 = vmatpush1.xpose.msra.mxu0 0.0
  %405 = vmatprep.subr.mxu0 0.0
  %406 = vmatpush1.xpose.msra.mxu0 0.0
  %407 = vmatprep.subr.mxu0 0.0
  %408 = vmatpush1.xpose.msra.mxu0 0.0
  %409 = vmatprep.subr.mxu0 0.0
  %410 = vmatpush1.xpose.msra.mxu0 0.0
  %411 = vmatprep.subr.mxu0 0.0
  %412 = vmatpush1.xpose.msra.mxu0 0.0
  %413 = vmatprep.subr.mxu0 0.0
  %414 = vmatpush1.xpose.msra.mxu0 0.0
  %415 = vmatprep.subr.mxu0 0.0
  %416 = vmatpush1.xpose.msra.mxu0 0.0
  %417 = vmatprep.subr.mxu0 0.0
  %418 = vmatpush1.xpose.msra.mxu0 0.0
  %419 = vmatprep.subr.mxu0 0.0
  %420 = vmatpush1.xpose.msra.mxu0 0.0
  %421 = vmatprep.subr.mxu0 0.0
  %422 = vmatpush1.xpose.msra.mxu0 0.0
  %423 = vmatprep.mubr.f32.mxu0 0.0
  %424 = vmatmul.mubr.f32.gmra.mrb[0].mxu0 %v30
  %v425 = vpop.f32.mrb[0].mxu0
  %v426 = vadd.f32 0.0, %v425
  %v427 = vpop.f32.mrb[0].mxu0
  %428 = vdwg.mxu0
  %v430 = vsel %vm28, %v347, 0
  %v433 = vsel %vm28, %v348, 0
  %435 = vmatprep.subr.mxu0 0.0
  %436 = vmatpush1.xpose.msra.mxu0 %v430
  %437 = vmatprep.subr.mxu0 0.0
  %438 = vmatpush1.xpose.msra.mxu0 %v433
  %439 = vmatprep.subr.mxu0 0.0
  %440 = vmatpush1.xpose.msra.mxu0 0.0
  %441 = vmatprep.subr.mxu0 0.0
  %442 = vmatpush1.xpose.msra.mxu0 0.0
  %443 = vmatprep.subr.mxu0 0.0
  %444 = vmatpush1.xpose.msra.mxu0 0.0
  %445 = vmatprep.subr.mxu0 0.0
  %446 = vmatpush1.xpose.msra.mxu0 0.0
  %447 = vmatprep.subr.mxu0 0.0
  %448 = vmatpush1.xpose.msra.mxu0 0.0
  %449 = vmatprep.subr.mxu0 0.0
  %450 = vmatpush1.xpose.msra.mxu0 0.0
  %451 = vmatprep.subr.mxu0 0.0
  %452 = vmatpush1.xpose.msra.mxu0 0.0
  %453 = vmatprep.subr.mxu0 0.0
  %454 = vmatpush1.xpose.msra.mxu0 0.0
  %455 = vmatprep.subr.mxu0 0.0
  %456 = vmatpush1.xpose.msra.mxu0 0.0
  %457 = vmatprep.subr.mxu0 0.0
  %458 = vmatpush1.xpose.msra.mxu0 0.0
  %459 = vmatprep.subr.mxu0 0.0
  %460 = vmatpush1.xpose.msra.mxu0 0.0
  %461 = vmatprep.subr.mxu0 0.0
  %462 = vmatpush1.xpose.msra.mxu0 0.0
  %463 = vmatprep.subr.mxu0 0.0
  %464 = vmatpush1.xpose.msra.mxu0 0.0
  %465 = vmatprep.subr.mxu0 0.0
  %466 = vmatpush1.xpose.msra.mxu0 0.0
  %467 = vmatprep.subr.mxu0 0.0
  %468 = vmatpush1.xpose.msra.mxu0 0.0
  %469 = vmatprep.subr.mxu0 0.0
  %470 = vmatpush1.xpose.msra.mxu0 0.0
  %471 = vmatprep.subr.mxu0 0.0
  %472 = vmatpush1.xpose.msra.mxu0 0.0
  %473 = vmatprep.subr.mxu0 0.0
  %474 = vmatpush1.xpose.msra.mxu0 0.0
  %475 = vmatprep.subr.mxu0 0.0
  %476 = vmatpush1.xpose.msra.mxu0 0.0
  %477 = vmatprep.subr.mxu0 0.0
  %478 = vmatpush1.xpose.msra.mxu0 0.0
  %479 = vmatprep.subr.mxu0 0.0
  %480 = vmatpush1.xpose.msra.mxu0 0.0
  %481 = vmatprep.subr.mxu0 0.0
  %482 = vmatpush1.xpose.msra.mxu0 0.0
  %483 = vmatprep.subr.mxu0 0.0
  %484 = vmatpush1.xpose.msra.mxu0 0.0
  %485 = vmatprep.subr.mxu0 0.0
  %486 = vmatpush1.xpose.msra.mxu0 0.0
  %487 = vmatprep.subr.mxu0 0.0
  %488 = vmatpush1.xpose.msra.mxu0 0.0
  %489 = vmatprep.subr.mxu0 0.0
  %490 = vmatpush1.xpose.msra.mxu0 0.0
  %491 = vmatprep.subr.mxu0 0.0
  %492 = vmatpush1.xpose.msra.mxu0 0.0
  %493 = vmatprep.subr.mxu0 0.0
  %494 = vmatpush1.xpose.msra.mxu0 0.0
  %495 = vmatprep.subr.mxu0 0.0
  %496 = vmatpush1.xpose.msra.mxu0 0.0
  %497 = vmatprep.subr.mxu0 0.0
  %498 = vmatpush1.xpose.msra.mxu0 0.0
  %499 = vmatprep.mubr.f32.mxu0 0.0
  %500 = vmatmul.mubr.f32.gmra.mrb[0].mxu0 %v109
  %v501 = vpop.f32.mrb[0].mxu0
  %v502 = vadd.f32 0.0, %v501
  %v503 = vpop.f32.mrb[0].mxu0
  %504 = vdwg.mxu0
  %v506 = vsel %vm28, %v349, 0
  %v509 = vsel %vm28, %v350, 0
  %511 = vmatprep.subr.mxu0 0.0
  %512 = vmatpush1.xpose.msra.mxu0 %v506
  %513 = vmatprep.subr.mxu0 0.0
  %514 = vmatpush1.xpose.msra.mxu0 %v509
  %515 = vmatprep.subr.mxu0 0.0
  %516 = vmatpush1.xpose.msra.mxu0 0.0
  %517 = vmatprep.subr.mxu0 0.0
  %518 = vmatpush1.xpose.msra.mxu0 0.0
  %519 = vmatprep.subr.mxu0 0.0
  %520 = vmatpush1.xpose.msra.mxu0 0.0
  %521 = vmatprep.subr.mxu0 0.0
  %522 = vmatpush1.xpose.msra.mxu0 0.0
  %523 = vmatprep.subr.mxu0 0.0
  %524 = vmatpush1.xpose.msra.mxu0 0.0
  %525 = vmatprep.subr.mxu0 0.0
  %526 = vmatpush1.xpose.msra.mxu0 0.0
  %527 = vmatprep.subr.mxu0 0.0
  %528 = vmatpush1.xpose.msra.mxu0 0.0
  %529 = vmatprep.subr.mxu0 0.0
  %530 = vmatpush1.xpose.msra.mxu0 0.0
  %531 = vmatprep.subr.mxu0 0.0
  %532 = vmatpush1.xpose.msra.mxu0 0.0
  %533 = vmatprep.subr.mxu0 0.0
  %534 = vmatpush1.xpose.msra.mxu0 0.0
  %535 = vmatprep.subr.mxu0 0.0
  %536 = vmatpush1.xpose.msra.mxu0 0.0
  %537 = vmatprep.subr.mxu0 0.0
  %538 = vmatpush1.xpose.msra.mxu0 0.0
  %539 = vmatprep.subr.mxu0 0.0
  %540 = vmatpush1.xpose.msra.mxu0 0.0
  %541 = vmatprep.subr.mxu0 0.0
  %542 = vmatpush1.xpose.msra.mxu0 0.0
  %543 = vmatprep.subr.mxu0 0.0
  %544 = vmatpush1.xpose.msra.mxu0 0.0
  %545 = vmatprep.subr.mxu0 0.0
  %546 = vmatpush1.xpose.msra.mxu0 0.0
  %547 = vmatprep.subr.mxu0 0.0
  %548 = vmatpush1.xpose.msra.mxu0 0.0
  %549 = vmatprep.subr.mxu0 0.0
  %550 = vmatpush1.xpose.msra.mxu0 0.0
  %551 = vmatprep.subr.mxu0 0.0
  %552 = vmatpush1.xpose.msra.mxu0 0.0
  %553 = vmatprep.subr.mxu0 0.0
  %554 = vmatpush1.xpose.msra.mxu0 0.0
  %555 = vmatprep.subr.mxu0 0.0
  %556 = vmatpush1.xpose.msra.mxu0 0.0
  %557 = vmatprep.subr.mxu0 0.0
  %558 = vmatpush1.xpose.msra.mxu0 0.0
  %559 = vmatprep.subr.mxu0 0.0
  %560 = vmatpush1.xpose.msra.mxu0 0.0
  %561 = vmatprep.subr.mxu0 0.0
  %562 = vmatpush1.xpose.msra.mxu0 0.0
  %563 = vmatprep.subr.mxu0 0.0
  %564 = vmatpush1.xpose.msra.mxu0 0.0
  %565 = vmatprep.subr.mxu0 0.0
  %566 = vmatpush1.xpose.msra.mxu0 0.0
  %567 = vmatprep.subr.mxu0 0.0
  %568 = vmatpush1.xpose.msra.mxu0 0.0
  %569 = vmatprep.subr.mxu0 0.0
  %570 = vmatpush1.xpose.msra.mxu0 0.0
  %571 = vmatprep.subr.mxu0 0.0
  %572 = vmatpush1.xpose.msra.mxu0 0.0
  %573 = vmatprep.subr.mxu0 0.0
  %574 = vmatpush1.xpose.msra.mxu0 0.0
  %575 = vmatprep.mubr.f32.mxu0 0.0
  %576 = vmatmul.mubr.f32.gmra.mrb[0].mxu0 %v188
  %v577 = vpop.f32.mrb[0].mxu0
  %v578 = vadd.f32 0.0, %v577
  %v579 = vpop.f32.mrb[0].mxu0
  %580 = vdwg.mxu0
  %v582 = vsel %vm28, %v351, 0
  %v585 = vsel %vm28, %v352, 0
  %587 = vmatprep.subr.mxu0 0.0
  %588 = vmatpush1.xpose.msra.mxu0 %v582
  %589 = vmatprep.subr.mxu0 0.0
  %590 = vmatpush1.xpose.msra.mxu0 %v585
  %591 = vmatprep.subr.mxu0 0.0
  %592 = vmatpush1.xpose.msra.mxu0 0.0
  %593 = vmatprep.subr.mxu0 0.0
  %594 = vmatpush1.xpose.msra.mxu0 0.0
  %595 = vmatprep.subr.mxu0 0.0
  %596 = vmatpush1.xpose.msra.mxu0 0.0
  %597 = vmatprep.subr.mxu0 0.0
  %598 = vmatpush1.xpose.msra.mxu0 0.0
  %599 = vmatprep.subr.mxu0 0.0
  %600 = vmatpush1.xpose.msra.mxu0 0.0
  %601 = vmatprep.subr.mxu0 0.0
  %602 = vmatpush1.xpose.msra.mxu0 0.0
  %603 = vmatprep.subr.mxu0 0.0
  %604 = vmatpush1.xpose.msra.mxu0 0.0
  %605 = vmatprep.subr.mxu0 0.0
  %606 = vmatpush1.xpose.msra.mxu0 0.0
  %607 = vmatprep.subr.mxu0 0.0
  %608 = vmatpush1.xpose.msra.mxu0 0.0
  %609 = vmatprep.subr.mxu0 0.0
  %610 = vmatpush1.xpose.msra.mxu0 0.0
  %611 = vmatprep.subr.mxu0 0.0
  %612 = vmatpush1.xpose.msra.mxu0 0.0
  %613 = vmatprep.subr.mxu0 0.0
  %614 = vmatpush1.xpose.msra.mxu0 0.0
  %615 = vmatprep.subr.mxu0 0.0
  %616 = vmatpush1.xpose.msra.mxu0 0.0
  %617 = vmatprep.subr.mxu0 0.0
  %618 = vmatpush1.xpose.msra.mxu0 0.0
  %619 = vmatprep.subr.mxu0 0.0
  %620 = vmatpush1.xpose.msra.mxu0 0.0
  %621 = vmatprep.subr.mxu0 0.0
  %622 = vmatpush1.xpose.msra.mxu0 0.0
  %623 = vmatprep.subr.mxu0 0.0
  %624 = vmatpush1.xpose.msra.mxu0 0.0
  %625 = vmatprep.subr.mxu0 0.0
  %626 = vmatpush1.xpose.msra.mxu0 0.0
  %627 = vmatprep.subr.mxu0 0.0
  %628 = vmatpush1.xpose.msra.mxu0 0.0
  %629 = vmatprep.subr.mxu0 0.0
  %630 = vmatpush1.xpose.msra.mxu0 0.0
  %631 = vmatprep.subr.mxu0 0.0
  %632 = vmatpush1.xpose.msra.mxu0 0.0
  %633 = vmatprep.subr.mxu0 0.0
  %634 = vmatpush1.xpose.msra.mxu0 0.0
  %635 = vmatprep.subr.mxu0 0.0
  %636 = vmatpush1.xpose.msra.mxu0 0.0
  %637 = vmatprep.subr.mxu0 0.0
  %638 = vmatpush1.xpose.msra.mxu0 0.0
  %639 = vmatprep.subr.mxu0 0.0
  %640 = vmatpush1.xpose.msra.mxu0 0.0
  %641 = vmatprep.subr.mxu0 0.0
  %642 = vmatpush1.xpose.msra.mxu0 0.0
  %643 = vmatprep.subr.mxu0 0.0
  %644 = vmatpush1.xpose.msra.mxu0 0.0
  %645 = vmatprep.subr.mxu0 0.0
  %646 = vmatpush1.xpose.msra.mxu0 0.0
  %647 = vmatprep.subr.mxu0 0.0
  %648 = vmatpush1.xpose.msra.mxu0 0.0
  %649 = vmatprep.subr.mxu0 0.0
  %650 = vmatpush1.xpose.msra.mxu0 0.0
  %651 = vmatprep.mubr.f32.mxu0 0.0
  %652 = vmatmul.mubr.f32.gmra.mrb[0].mxu0 %v267
  %v653 = vpop.f32.mrb[0].mxu0
  %v654 = vadd.f32 0.0, %v653
  %v655 = vpop.f32.mrb[0].mxu0
  %656 = vdwg.mxu0
  %vm657 = vcmask 130048
  %v658 = vsel %vm657, %v105, -inf
  %659 = vmax.xlane.f32.xlu0 %v658
  %v660 = vpop.xlane.xlu0 %659
  %v661 = vsel %vm657, %v184, -inf
  %662 = vmax.xlane.f32.xlu0 %v661
  %v663 = vpop.xlane.xlu0 %662
  %v664 = vsel %vm657, %v263, -inf
  %665 = vmax.xlane.f32.xlu0 %v664
  %v666 = vpop.xlane.xlu0 %665
  %v667 = vsel %vm657, %v342, -inf
  %668 = vmax.xlane.f32.xlu0 %v667
  %v669 = vpop.xlane.xlu0 %668
  %v674 = vlaneseq
  %v675 = vand.u32 %v674, 127
  %v676 = vlaneseq
  %v677 = vshrl.u32 %v676, 7
  %v678 = vsub.s32 %v675, %v677
  %v679 = vrot.slane %v660, %v678
  %v680 = vlaneseq
  %v681 = vshrl.u32 %v680, 7
  %v682 = vsub.s32 %v675, %v681
  %v683 = vrot.slane %v663, %v682
  %v684 = vlaneseq
  %v685 = vshrl.u32 %v684, 7
  %v686 = vsub.s32 %v675, %v685
  %v687 = vrot.slane %v666, %v686
  %v688 = vlaneseq
  %v689 = vshrl.u32 %v688, 7
  %v690 = vsub.s32 %v675, %v689
  %v691 = vrot.slane %v669, %v690
  %vm692 = vcmask 1041409
  %v693 = vsel %vm692, %v683, %v679
  %vm694 = vcmask 1042434
  %v695 = vsel %vm694, %v687, %v693
  %vm696 = vcmask 1043459
  %v697 = vsel %vm696, %v691, %v695
  %vm699 = vcmask 60416
  %v700 = vsel %vm699, %v697, 0.0
  %701 = vadd.xlane.f32.xlu0 %v700
  %v702 = vpop.xlane.xlu0 %701
  %vm703 = vcmask 3072
  %704 = vst.msk [vmem:[%s3] sm:$0xf] %vm703, %v702
  %vm705 = vcmask 97280
  %v706 = vsel %vm705, %v426, -inf
  %707 = vmax.xlane.f32.xlu0 %v706
  %v708 = vpop.xlane.xlu0 %707
  %v709 = vsel %vm705, %v502, -inf
  %710 = vmax.xlane.f32.xlu0 %v709
  %v711 = vpop.xlane.xlu0 %710
  %v712 = vsel %vm705, %v578, -inf
  %713 = vmax.xlane.f32.xlu0 %v712
  %v714 = vpop.xlane.xlu0 %713
  %v715 = vsel %vm705, %v654, -inf
  %716 = vmax.xlane.f32.xlu0 %v715
  %v717 = vpop.xlane.xlu0 %716
  %v722 = vlaneseq
  %v723 = vshrl.u32 %v722, 7
  %v724 = vsub.s32 %v675, %v723
  %v725 = vrot.slane %v708, %v724
  %v726 = vlaneseq
  %v727 = vshrl.u32 %v726, 7
  %v728 = vsub.s32 %v675, %v727
  %v729 = vrot.slane %v711, %v728
  %v730 = vlaneseq
  %v731 = vshrl.u32 %v730, 7
  %v732 = vsub.s32 %v675, %v731
  %v733 = vrot.slane %v714, %v732
  %v734 = vlaneseq
  %v735 = vshrl.u32 %v734, 7
  %v736 = vsub.s32 %v675, %v735
  %v737 = vrot.slane %v717, %v736
  %v738 = vsel %vm692, %v729, %v725
  %v739 = vsel %vm694, %v733, %v738
  %v740 = vsel %vm696, %v737, %v739
  %v742 = vsel %vm699, %v740, 0.0
  %743 = vadd.xlane.f32.xlu0 %v742
  %v744 = vpop.xlane.xlu0 %743
  %745 = vst.msk [vmem:[%s4] sm:$0xf] %vm703, %v744
  // Predicated region
  $region14: #{tpu_custom_call.1} parent=0 // pred_check
    _
  $region15: #{tpu_custom_call.1} parent=0 // pred_check_branch
    %747 = sbr.rel (0) target = $region17
  $region16: #{tpu_custom_call.1} parent=0 // pred_region
    _
  $region17: #{tpu_custom_call.1} parent=0 // pred_fallthru
    _
  // Predicated region
  $region18: #{tpu_custom_call.1} parent=0 // pred_check
    _
  $region19: #{tpu_custom_call.1} parent=0 // pred_check_branch
    %749 = sbr.rel (0) target = $region21
  $region20: #{tpu_custom_call.1} parent=0 // pred_region
    _
  $region21: #{tpu_custom_call.1} parent=0 // pred_fallthru
    _
  // Predicated region
  $region22: #{tpu_custom_call.1} parent=0 // pred_check
    _
  $region23: #{tpu_custom_call.1} parent=0 // pred_check_branch
    %751 = sbr.rel (0) target = $region25
  $region24: #{tpu_custom_call.1} parent=0 // pred_region
    _
  $region25: #{tpu_custom_call.1} parent=0 // pred_fallthru
    _
  // Predicated region
  $region26: #{tpu_custom_call.1} parent=0 // pred_check
    _
  $region27: #{tpu_custom_call.1} parent=0 // pred_check_branch
    %753 = sbr.rel (0) target = $region29
  $region28: #{tpu_custom_call.1} parent=0 // pred_region
    _
  $region29: #{tpu_custom_call.1} parent=0 // pred_fallthru
    _

</llo_original>
